<compile_context>
chip_gen: v5e
topology: v5e:2x2
jax: 0.10.0
libtpu: 0.0.40
codegen_flags: <defaults>
</compile_context>

<pallas_src>
import functools

import jax
import jax.numpy as jnp
from jax.experimental import pallas as pl
from jax.experimental.pallas import tpu as pltpu

BN_EPS = 1e-5
SUBLANE = 8
F32_MAX = float(jnp.finfo(jnp.float32).max)
BF16_MAX = float(jnp.finfo(jnp.bfloat16).max)


def _round_up(n: int, m: int) -> int:
    return ((n + m - 1) // m) * m


def _feat_pad(d: int) -> int:
    # Tiny feature dims stay at 128 (no extra zero work); larger dims round to
    # 256 so v6e/v7x's 256x256 MXUs see full-width tiles (harmless on v5e).
    return _round_up(d, 128) if d <= 128 else _round_up(d, 256)


def _pad_to(a, shape):
    pads = [(0, t - s) for s, t in zip(a.shape, shape)]
    if any(p[1] for p in pads):
        return jnp.pad(a, pads)
    return a


def _nan_to_num(v):
    """torch.nan_to_num semantics for f32: nan->0, +inf->max, -inf->min."""
    v = jnp.where(jnp.isnan(v), jnp.float32(0.0), v)
    v = jnp.where(v == jnp.inf, jnp.float32(F32_MAX), v)
    v = jnp.where(v == -jnp.inf, jnp.float32(-F32_MAX), v)
    return v


def _mlp_kernel(x_ref, *refs, n_hidden: int, clip_value: float, batch_true: int):
    """Fused MLP forward (whole padded batch resident, no grid).

    refs layout (after x_ref):
      [(w_ref, bgb_ref) * n_hidden, w_out_ref, b_out_ref, o_ref]
    w's are (in_pad, out_pad) bf16; bgb is (3, h_pad) f32 = [bias; gamma; beta];
    b_out is (1, out_pad) f32.
    """
    o_ref = refs[-1]
    w_out_ref, b_out_ref = refs[-3], refs[-2]

    b_pad = x_ref.shape[0]
    use_mask = b_pad != batch_true          # trace-time constant
    inv_b = jnp.float32(1.0 / batch_true)   # BN stats use the TRUE batch size

    x = _nan_to_num(x_ref[...].astype(jnp.float32))
    # Saturate to the bf16 finite range so the cast below cannot turn the
    # +/-F32_MAX produced by _nan_to_num back into +/-inf.
    x = jnp.clip(x, -BF16_MAX, BF16_MAX)

    if use_mask:
        # Row-validity mask generated in-kernel (couple of VPU ops, no DMA).
        row_ids = jax.lax.broadcasted_iota(jnp.int32, (b_pad, 1), 0)
        row_mask = (row_ids < batch_true).astype(jnp.float32)

    h = x
    for li in range(n_hidden):
        w_ref, bgb_ref = refs[2 * li], refs[2 * li + 1]
        bgb = bgb_ref[...]                               # (3, h_pad)
        # Linear: bf16 x bf16 on the MXU, f32 accumulation, f32 bias add.
        h = jnp.dot(h.astype(jnp.bfloat16), w_ref[...],
                    preferred_element_type=jnp.float32) + bgb[0:1, :]
        # ReLU
        h = jnp.maximum(h, 0.0)
        # BatchNorm1d (training mode): single-pass sum / sum-of-squares over
        # the TRUE batch rows; biased variance, clamped at 0 before rsqrt.
        if use_mask:
            hm = h * row_mask
            s = jnp.sum(hm, axis=0, keepdims=True)
            sq = jnp.sum(hm * h, axis=0, keepdims=True)   # mask * h^2
        else:
            s = jnp.sum(h, axis=0, keepdims=True)
            sq = jnp.sum(h * h, axis=0, keepdims=True)
        mean = s * inv_b
        var = jnp.maximum(sq * inv_b - mean * mean, 0.0)
        inv_std = jax.lax.rsqrt(var + BN_EPS)             # EUP slot (cheap)
        scale = bgb[1:2, :] * inv_std                     # gamma * rsqrt(var+eps)
        shift = bgb[2:3, :] - mean * scale                # beta  - mean * scale
        h = h * scale + shift                             # fused affine
        # Dropout(p=0.0) => identity (module default)

    out = jnp.dot(h.astype(jnp.bfloat16), w_out_ref[...],
                  preferred_element_type=jnp.float32) + b_out_ref[...]
    out = _nan_to_num(out)
    out = jnp.clip(out, -clip_value, clip_value)
    o_ref[...] = out.astype(o_ref.dtype)                  # lane-dense store


def _vmem_limit_bytes() -> int:
    """~capacity - 16 MiB headroom, capped at 100 MiB (48 MiB on v7x)."""
    cap = 64 * 1024 * 1024
    try:
        cap = int(pltpu.get_tpu_info().vmem_capacity_bytes)
    except Exception:
        pass
    return int(min(100 * 1024 * 1024,
                   max(32 * 1024 * 1024, cap - 16 * 1024 * 1024)))


def mlp_forward(x, params, *, clip_value=1e6):
    """params = ([(w, b, gamma, beta), ...], (w_out, b_out)); w's are (in, out)."""
    hidden_params, (w_out, b_out) = params
    n_hidden = len(hidden_params)
    batch, in_dim = x.shape
    out_dim = w_out.shape[1]

    b_pad = _round_up(batch, SUBLANE)
    in_pad = _feat_pad(in_dim)
    out_pad = _feat_pad(out_dim)

    x_p = _pad_to(x.astype(jnp.float32), (b_pad, in_pad))

    flat_inputs = [x_p]
    prev_pad = in_pad
    for (w, b, g, be) in hidden_params:
        h_pad = _feat_pad(w.shape[1])
        bgb = jnp.stack([b, g, be]).astype(jnp.float32)   # (3, h)
        flat_inputs += [
            _pad_to(w.astype(jnp.bfloat16), (prev_pad, h_pad)),
            _pad_to(bgb, (3, h_pad)),
        ]
        prev_pad = h_pad
    flat_inputs += [
        _pad_to(w_out.astype(jnp.bfloat16), (prev_pad, out_pad)),
        _pad_to(b_out.reshape(1, -1).astype(jnp.float32), (1, out_pad)),
    ]

    # No grid: whole arrays placed in VMEM once, single-buffered (no useless
    # double-buffering of resident weights/activations).
    vmem_spec = pl.BlockSpec(memory_space=pltpu.MemorySpace.VMEM)

    kernel = functools.partial(_mlp_kernel, n_hidden=n_hidden,
                               clip_value=float(clip_value), batch_true=batch)

    out_padded = pl.pallas_call(
        kernel,
        out_shape=jax.ShapeDtypeStruct((b_pad, out_pad), jnp.float32),
        in_specs=[vmem_spec] * len(flat_inputs),
        out_specs=vmem_spec,
        compiler_params=pltpu.CompilerParams(
            vmem_limit_bytes=_vmem_limit_bytes()),
    )(*flat_inputs)

    return out_padded[:batch, :out_dim]


def mlp_reference(x, params, *, clip_value=1e6):
    """Pure-JAX f32 reference mirroring the PyTorch module (training-mode BN)."""
    hidden_params, (w_out, b_out) = params
    h = jnp.nan_to_num(x.astype(jnp.float32))
    for (w, b, g, be) in hidden_params:
        h = h @ w + b
        h = jnp.maximum(h, 0.0)
        mean = jnp.mean(h, axis=0, keepdims=True)
        var = jnp.mean((h - mean) ** 2, axis=0, keepdims=True)
        h = (h - mean) * jax.lax.rsqrt(var + BN_EPS) * g + be
    out = h @ w_out + b_out
    out = jnp.nan_to_num(out)
    return jnp.clip(out, -clip_value, clip_value)


def init_mlp_params(key, input_dim, hidden_dims, output_dim):
    """nn.Linear-style init (uniform +/- 1/sqrt(fan_in)); BN gamma=1, beta=0.
    Weights stored transposed as (in, out)."""
    hidden_params = []
    prev = input_dim
    for h in hidden_dims:
        key, kw, kb = jax.random.split(key, 3)
        bound = 1.0 / float(jnp.sqrt(prev))
        w = jax.random.uniform(kw, (prev, h), jnp.float32, -bound, bound)
        b = jax.random.uniform(kb, (h,), jnp.float32, -bound, bound)
        hidden_params.append((w, b, jnp.ones((h,), jnp.float32),
                              jnp.zeros((h,), jnp.float32)))
        prev = h
    key, kw, kb = jax.random.split(key, 3)
    bound = 1.0 / float(jnp.sqrt(prev))
    w_out = jax.random.uniform(kw, (prev, output_dim), jnp.float32, -bound, bound)
    b_out = jax.random.uniform(kb, (output_dim,), jnp.float32, -bound, bound)
    return hidden_params, (w_out, b_out)


if __name__ == "__main__":
    input_dim, hidden_dims, output_dim = 16, [32, 32], 4
    batch = 30   # deliberately not a multiple of 8: exercises the BN row mask

    key = jax.random.PRNGKey(0)
    key, kx = jax.random.split(key)
    x = jax.random.normal(kx, (batch, input_dim), jnp.float32)

    params = init_mlp_params(key, input_dim, hidden_dims, output_dim)

    out = mlp_forward(x, params, clip_value=1e6)
    out = jax.block_until_ready(out)

    assert out.shape == (batch, output_dim)
    assert not bool(jnp.isnan(out).any())

    ref = mlp_reference(x, params, clip_value=1e6)
    # bf16 matmuls with f32 accumulation -> relaxed tolerance vs f32 reference.
    assert bool(jnp.allclose(out, ref, rtol=2e-1, atol=2e-1)), (
        f"max abs err {float(jnp.max(jnp.abs(out - ref)))}")

    print("KERNEL_OK")
</pallas_src>

<mosaic_0001>
module attributes {stable_mosaic.version = 11 : i64} {
  func.func @_mlp_kernel(%arg0: memref<32x128xf32, #tpu.memory_space<vmem>>, %arg1: memref<128x128xbf16, #tpu.memory_space<vmem>>, %arg2: memref<3x128xf32, #tpu.memory_space<vmem>>, %arg3: memref<128x128xbf16, #tpu.memory_space<vmem>>, %arg4: memref<3x128xf32, #tpu.memory_space<vmem>>, %arg5: memref<128x128xbf16, #tpu.memory_space<vmem>>, %arg6: memref<1x128xf32, #tpu.memory_space<vmem>>, %arg7: memref<32x128xf32, #tpu.memory_space<vmem>>) attributes {dimension_semantics = [], scalar_prefetch = 0 : i64, scratch_operands = 0 : i64, tpu.core_type = #tpu.core_type<tc>} {
    %c0 = arith.constant 0 : index
    %c0_0 = arith.constant 0 : index
    %0 = vector.load %arg0[%c0, %c0_0] : memref<32x128xf32, #tpu.memory_space<vmem>>, vector<32x128xf32>
    %1 = arith.cmpf one, %0, %0 : vector<32x128xf32>
    %cst = arith.constant 0.000000e+00 : f32
    %2 = vector.broadcast %cst : f32 to vector<32x128xf32>
    %3 = arith.select %1, %2, %0 : vector<32x128xi1>, vector<32x128xf32>
    %cst_1 = arith.constant 0x7F800000 : f32
    %4 = vector.broadcast %cst_1 : f32 to vector<32x128xf32>
    %5 = arith.cmpf oeq, %3, %4 : vector<32x128xf32>
    %cst_2 = arith.constant 3.40282347E+38 : f32
    %6 = vector.broadcast %cst_2 : f32 to vector<32x128xf32>
    %7 = arith.select %5, %6, %3 : vector<32x128xi1>, vector<32x128xf32>
    %cst_3 = arith.constant 0xFF800000 : f32
    %8 = vector.broadcast %cst_3 : f32 to vector<32x128xf32>
    %9 = arith.cmpf oeq, %7, %8 : vector<32x128xf32>
    %cst_4 = arith.constant -3.40282347E+38 : f32
    %10 = vector.broadcast %cst_4 : f32 to vector<32x128xf32>
    %11 = arith.select %9, %10, %7 : vector<32x128xi1>, vector<32x128xf32>
    %cst_5 = arith.constant -3.38953139E+38 : f32
    %cst_6 = arith.constant 3.38953139E+38 : f32
    %12 = vector.broadcast %cst_5 : f32 to vector<32x128xf32>
    %13 = arith.maximumf %12, %11 : vector<32x128xf32>
    %14 = vector.broadcast %cst_6 : f32 to vector<32x128xf32>
    %15 = arith.minimumf %14, %13 : vector<32x128xf32>
    %16 = tpu.iota {dimensions = array<i32: 0>} : vector<32x1xi32>
    %c30_i32 = arith.constant 30 : i32
    %17 = vector.broadcast %c30_i32 : i32 to vector<32x1xi32>
    %18 = arith.cmpi slt, %16, %17 : vector<32x1xi32>
    %19 = arith.extui %18 : vector<32x1xi1> to vector<32x1xi32>
    %20 = arith.sitofp %19 : vector<32x1xi32> to vector<32x1xf32>
    %c0_7 = arith.constant 0 : index
    %c0_8 = arith.constant 0 : index
    %21 = vector.load %arg2[%c0_7, %c0_8] : memref<3x128xf32, #tpu.memory_space<vmem>>, vector<3x128xf32>
    %22 = arith.truncf %15 : vector<32x128xf32> to vector<32x128xbf16>
    %c0_9 = arith.constant 0 : index
    %c0_10 = arith.constant 0 : index
    %23 = vector.load %arg1[%c0_9, %c0_10] : memref<128x128xbf16, #tpu.memory_space<vmem>>, vector<128x128xbf16>
    %cst_11 = arith.constant dense<0.000000e+00> : vector<32x128xf32>
    %24 = tpu.matmul %22, %23, %cst_11 {dimension_numbers = #tpu.dot_dimension_numbers<[1], [0], [0], [1], [0, 0, 1, 1], [], []>} : vector<32x128xbf16>, vector<128x128xbf16>, vector<32x128xf32> -> vector<32x128xf32>
    %25 = vector.extract_strided_slice %21 {offsets = [0, 0], sizes = [1, 128], strides = [1, 1]} : vector<3x128xf32> to vector<1x128xf32>
    %26 = vector.broadcast %25 : vector<1x128xf32> to vector<32x128xf32>
    %27 = arith.addf %24, %26 : vector<32x128xf32>
    %cst_12 = arith.constant 0.000000e+00 : f32
    %28 = vector.broadcast %cst_12 : f32 to vector<32x128xf32>
    %29 = arith.maximumf %27, %28 : vector<32x128xf32>
    %30 = vector.broadcast %20 : vector<32x1xf32> to vector<32x128xf32>
    %31 = arith.mulf %29, %30 : vector<32x128xf32>
    %cst_13 = arith.constant dense<0.000000e+00> : vector<128xf32>
    %32 = vector.multi_reduction <add>, %31, %cst_13 [0] : vector<32x128xf32> to vector<128xf32>
    %33 = vector.shape_cast %32 : vector<128xf32> to vector<1x128xf32>
    %34 = arith.mulf %31, %29 : vector<32x128xf32>
    %cst_14 = arith.constant dense<0.000000e+00> : vector<128xf32>
    %35 = vector.multi_reduction <add>, %34, %cst_14 [0] : vector<32x128xf32> to vector<128xf32>
    %36 = vector.shape_cast %35 : vector<128xf32> to vector<1x128xf32>
    %cst_15 = arith.constant 0.0333333351 : f32
    %37 = vector.broadcast %cst_15 : f32 to vector<1x128xf32>
    %38 = arith.mulf %33, %37 : vector<1x128xf32>
    %cst_16 = arith.constant 0.0333333351 : f32
    %39 = vector.broadcast %cst_16 : f32 to vector<1x128xf32>
    %40 = arith.mulf %36, %39 : vector<1x128xf32>
    %41 = arith.mulf %38, %38 : vector<1x128xf32>
    %42 = arith.subf %40, %41 : vector<1x128xf32>
    %cst_17 = arith.constant 0.000000e+00 : f32
    %43 = vector.broadcast %cst_17 : f32 to vector<1x128xf32>
    %44 = arith.maximumf %42, %43 : vector<1x128xf32>
    %cst_18 = arith.constant 9.99999974E-6 : f32
    %45 = vector.broadcast %cst_18 : f32 to vector<1x128xf32>
    %46 = arith.addf %44, %45 : vector<1x128xf32>
    %47 = math.rsqrt %46 : vector<1x128xf32>
    %48 = vector.extract_strided_slice %21 {offsets = [1, 0], sizes = [1, 128], strides = [1, 1]} : vector<3x128xf32> to vector<1x128xf32>
    %49 = arith.mulf %48, %47 : vector<1x128xf32>
    %50 = vector.extract_strided_slice %21 {offsets = [2, 0], sizes = [1, 128], strides = [1, 1]} : vector<3x128xf32> to vector<1x128xf32>
    %51 = arith.mulf %38, %49 : vector<1x128xf32>
    %52 = arith.subf %50, %51 : vector<1x128xf32>
    %53 = vector.broadcast %49 : vector<1x128xf32> to vector<32x128xf32>
    %54 = arith.mulf %29, %53 : vector<32x128xf32>
    %55 = vector.broadcast %52 : vector<1x128xf32> to vector<32x128xf32>
    %56 = arith.addf %54, %55 : vector<32x128xf32>
    %c0_19 = arith.constant 0 : index
    %c0_20 = arith.constant 0 : index
    %57 = vector.load %arg4[%c0_19, %c0_20] : memref<3x128xf32, #tpu.memory_space<vmem>>, vector<3x128xf32>
    %58 = arith.truncf %56 : vector<32x128xf32> to vector<32x128xbf16>
    %c0_21 = arith.constant 0 : index
    %c0_22 = arith.constant 0 : index
    %59 = vector.load %arg3[%c0_21, %c0_22] : memref<128x128xbf16, #tpu.memory_space<vmem>>, vector<128x128xbf16>
    %cst_23 = arith.constant dense<0.000000e+00> : vector<32x128xf32>
    %60 = tpu.matmul %58, %59, %cst_23 {dimension_numbers = #tpu.dot_dimension_numbers<[1], [0], [0], [1], [0, 0, 1, 1], [], []>} : vector<32x128xbf16>, vector<128x128xbf16>, vector<32x128xf32> -> vector<32x128xf32>
    %61 = vector.extract_strided_slice %57 {offsets = [0, 0], sizes = [1, 128], strides = [1, 1]} : vector<3x128xf32> to vector<1x128xf32>
    %62 = vector.broadcast %61 : vector<1x128xf32> to vector<32x128xf32>
    %63 = arith.addf %60, %62 : vector<32x128xf32>
    %cst_24 = arith.constant 0.000000e+00 : f32
    %64 = vector.broadcast %cst_24 : f32 to vector<32x128xf32>
    %65 = arith.maximumf %63, %64 : vector<32x128xf32>
    %66 = vector.broadcast %20 : vector<32x1xf32> to vector<32x128xf32>
    %67 = arith.mulf %65, %66 : vector<32x128xf32>
    %cst_25 = arith.constant dense<0.000000e+00> : vector<128xf32>
    %68 = vector.multi_reduction <add>, %67, %cst_25 [0] : vector<32x128xf32> to vector<128xf32>
    %69 = vector.shape_cast %68 : vector<128xf32> to vector<1x128xf32>
    %70 = arith.mulf %67, %65 : vector<32x128xf32>
    %cst_26 = arith.constant dense<0.000000e+00> : vector<128xf32>
    %71 = vector.multi_reduction <add>, %70, %cst_26 [0] : vector<32x128xf32> to vector<128xf32>
    %72 = vector.shape_cast %71 : vector<128xf32> to vector<1x128xf32>
    %cst_27 = arith.constant 0.0333333351 : f32
    %73 = vector.broadcast %cst_27 : f32 to vector<1x128xf32>
    %74 = arith.mulf %69, %73 : vector<1x128xf32>
    %cst_28 = arith.constant 0.0333333351 : f32
    %75 = vector.broadcast %cst_28 : f32 to vector<1x128xf32>
    %76 = arith.mulf %72, %75 : vector<1x128xf32>
    %77 = arith.mulf %74, %74 : vector<1x128xf32>
    %78 = arith.subf %76, %77 : vector<1x128xf32>
    %cst_29 = arith.constant 0.000000e+00 : f32
    %79 = vector.broadcast %cst_29 : f32 to vector<1x128xf32>
    %80 = arith.maximumf %78, %79 : vector<1x128xf32>
    %cst_30 = arith.constant 9.99999974E-6 : f32
    %81 = vector.broadcast %cst_30 : f32 to vector<1x128xf32>
    %82 = arith.addf %80, %81 : vector<1x128xf32>
    %83 = math.rsqrt %82 : vector<1x128xf32>
    %84 = vector.extract_strided_slice %57 {offsets = [1, 0], sizes = [1, 128], strides = [1, 1]} : vector<3x128xf32> to vector<1x128xf32>
    %85 = arith.mulf %84, %83 : vector<1x128xf32>
    %86 = vector.extract_strided_slice %57 {offsets = [2, 0], sizes = [1, 128], strides = [1, 1]} : vector<3x128xf32> to vector<1x128xf32>
    %87 = arith.mulf %74, %85 : vector<1x128xf32>
    %88 = arith.subf %86, %87 : vector<1x128xf32>
    %89 = vector.broadcast %85 : vector<1x128xf32> to vector<32x128xf32>
    %90 = arith.mulf %65, %89 : vector<32x128xf32>
    %91 = vector.broadcast %88 : vector<1x128xf32> to vector<32x128xf32>
    %92 = arith.addf %90, %91 : vector<32x128xf32>
    %93 = arith.truncf %92 : vector<32x128xf32> to vector<32x128xbf16>
    %c0_31 = arith.constant 0 : index
    %c0_32 = arith.constant 0 : index
    %94 = vector.load %arg5[%c0_31, %c0_32] : memref<128x128xbf16, #tpu.memory_space<vmem>>, vector<128x128xbf16>
    %cst_33 = arith.constant dense<0.000000e+00> : vector<32x128xf32>
    %95 = tpu.matmul %93, %94, %cst_33 {dimension_numbers = #tpu.dot_dimension_numbers<[1], [0], [0], [1], [0, 0, 1, 1], [], []>} : vector<32x128xbf16>, vector<128x128xbf16>, vector<32x128xf32> -> vector<32x128xf32>
    %c0_34 = arith.constant 0 : index
    %c0_35 = arith.constant 0 : index
    %96 = vector.load %arg6[%c0_34, %c0_35] : memref<1x128xf32, #tpu.memory_space<vmem>>, vector<1x128xf32>
    %97 = vector.broadcast %96 : vector<1x128xf32> to vector<32x128xf32>
    %98 = arith.addf %95, %97 : vector<32x128xf32>
    %99 = arith.cmpf one, %98, %98 : vector<32x128xf32>
    %cst_36 = arith.constant 0.000000e+00 : f32
    %100 = vector.broadcast %cst_36 : f32 to vector<32x128xf32>
    %101 = arith.select %99, %100, %98 : vector<32x128xi1>, vector<32x128xf32>
    %cst_37 = arith.constant 0x7F800000 : f32
    %102 = vector.broadcast %cst_37 : f32 to vector<32x128xf32>
    %103 = arith.cmpf oeq, %101, %102 : vector<32x128xf32>
    %cst_38 = arith.constant 3.40282347E+38 : f32
    %104 = vector.broadcast %cst_38 : f32 to vector<32x128xf32>
    %105 = arith.select %103, %104, %101 : vector<32x128xi1>, vector<32x128xf32>
    %cst_39 = arith.constant 0xFF800000 : f32
    %106 = vector.broadcast %cst_39 : f32 to vector<32x128xf32>
    %107 = arith.cmpf oeq, %105, %106 : vector<32x128xf32>
    %cst_40 = arith.constant -3.40282347E+38 : f32
    %108 = vector.broadcast %cst_40 : f32 to vector<32x128xf32>
    %109 = arith.select %107, %108, %105 : vector<32x128xi1>, vector<32x128xf32>
    %cst_41 = arith.constant -1.000000e+06 : f32
    %cst_42 = arith.constant 1.000000e+06 : f32
    %110 = vector.broadcast %cst_41 : f32 to vector<32x128xf32>
    %111 = arith.maximumf %110, %109 : vector<32x128xf32>
    %112 = vector.broadcast %cst_42 : f32 to vector<32x128xf32>
    %113 = arith.minimumf %112, %111 : vector<32x128xf32>
    %c0_43 = arith.constant 0 : index
    %c0_44 = arith.constant 0 : index
    %114 = vector.load %arg7[%c0_43, %c0_44] : memref<32x128xf32, #tpu.memory_space<vmem>>, vector<32x128xf32>
    tpu.vector_store %arg7[%c0_43, %c0_44], %113 {strides = array<i32>} : memref<32x128xf32, #tpu.memory_space<vmem>>, vector<32x128xf32>,
    return
  }
}

</mosaic_0001>

<llo_original>
// kernel: tpu_custom_call.1
$region0: #{tpu_custom_call.1}
  #allocation0 [shape = 'u32[]', space=smem, size = 0x4, offset = 0x4, fixed_abs, tag = 'smem constant byte address 0x4 - core index']
  #allocation1 [shape = 'u32[72,128]{1,0:T(1,128)}', space=vmem, size = 0x9000, scoped, tag = 'internal scratch']
  %s0 = inlined_call_operand.hbm [shape: f32[32,128], index: 0, kind: input, shape index: {}]
  %s1 = inlined_call_operand.hbm [shape: bf16[128,128], index: 1, kind: input, shape index: {}]
  %s2 = inlined_call_operand.hbm [shape: f32[3,128], index: 2, kind: input, shape index: {}]
  %s3 = inlined_call_operand.hbm [shape: bf16[128,128], index: 3, kind: input, shape index: {}]
  %s4 = inlined_call_operand.hbm [shape: f32[3,128], index: 4, kind: input, shape index: {}]
  %s5 = inlined_call_operand.hbm [shape: bf16[128,128], index: 5, kind: input, shape index: {}]
  %s6 = inlined_call_operand.vmem [shape: f32[1,128], index: 6, kind: input, shape index: {}]
  %s7 = inlined_call_operand.hbm [shape: f32[32,128], index: 7, kind: output, shape index: {}]
  %s8 = sld [smem:[#allocation0]]
  $region62: #{tpu_custom_call.1} parent=0
    _
  %s10 = ssub.s32 1, %s8
  %s11 = scalar_select 0, %s10, %s8
  $region1: #{tpu_custom_call.1} parent=0
    #allocation2 [shape = 'u8[16384]{0}', space=vmem, size = 0x4000, scoped, tag = 'input window, operand 0, single buffered']
    #allocation3 [shape = 's32[1]{0}', space=sflag, size = 0x4, scoped, tag = 'scoped memory for tpu_custom_call.1']
    #allocation4 [shape = 's32[1]{0}', space=sflag, size = 0x4, scoped, tag = 'scoped memory for tpu_custom_call.1']
    #allocation5 [shape = 'u8[32768]{0}', space=vmem, size = 0x8000, scoped, tag = 'input window, operand 1, single buffered']
    #allocation6 [shape = 's32[1]{0}', space=sflag, size = 0x4, scoped, tag = 'scoped memory for tpu_custom_call.1']
    #allocation7 [shape = 'u8[2048]{0}', space=vmem, size = 0x800, scoped, tag = 'input window, operand 2, single buffered']
    #allocation8 [shape = 'u8[32768]{0}', space=vmem, size = 0x8000, scoped, tag = 'input window, operand 3, single buffered']
    #allocation9 [shape = 's32[1]{0}', space=sflag, size = 0x4, scoped, tag = 'scoped memory for tpu_custom_call.1']
    #allocation10 [shape = 'u8[2048]{0}', space=vmem, size = 0x800, scoped, tag = 'input window, operand 4, single buffered']
    #allocation11 [shape = 'u8[32768]{0}', space=vmem, size = 0x8000, scoped, tag = 'input window, operand 5, single buffered']
    #allocation12 [shape = 's32[1]{0}', space=sflag, size = 0x4, scoped, tag = 'scoped memory for tpu_custom_call.1']
    #allocation13 [shape = 'u8[16384]{0}', space=vmem, size = 0x4000, scoped, tag = 'output window, operand 0, single buffered']
    %12 = vsyncpa [#allocation3], 0
    %13 = vsyncpa [#allocation6], 0
    %14 = vsyncpa [#allocation9], 0
    %15 = vsyncpa [#allocation12], 0
    %16 = vsyncpa [#allocation4], 0
    // Predicated region
    $region2: #{tpu_custom_call.1} parent=1 // pred_check
      _
    $region3: #{tpu_custom_call.1} parent=1 // pred_check_branch
      %18 = sbr.rel (0) target = $region5
    $region4: #{tpu_custom_call.1} parent=1 // pred_region
      %20 = vsyncadd [#allocation3], 0
      %s21 = sshll.u32 %s0, 4
      %s22 = int_to_ptr.hbm [resolvable:$true] %s21
      %s23 = sshll.u32 [#allocation2], 4
      %s24 = int_to_ptr.vmem [resolvable:$true] %s23
      %29 = dma.hbm_to_vmem [thread:$0]  %s22, 512, %s24, [#allocation3], 128, 128, 8
    $region5: #{tpu_custom_call.1} parent=1 // pred_fallthru
      _
    // Predicated region
    $region6: #{tpu_custom_call.1} parent=1 // pred_check
      _
    $region7: #{tpu_custom_call.1} parent=1 // pred_check_branch
      %31 = sbr.rel (0) target = $region9
    $region8: #{tpu_custom_call.1} parent=1 // pred_region
      %33 = vsyncadd [#allocation6], 0
      %s34 = sshll.u32 %s1, 4
      %s35 = int_to_ptr.hbm [resolvable:$true] %s34
      %s36 = sshll.u32 [#allocation5], 4
      %s37 = int_to_ptr.vmem [resolvable:$true] %s36
      %42 = dma.hbm_to_vmem [thread:$0]  %s35, 1024, %s37, [#allocation6], 64, 64, 4
    $region9: #{tpu_custom_call.1} parent=1 // pred_fallthru
      _
    // Predicated region
    $region10: #{tpu_custom_call.1} parent=1 // pred_check
      _
    $region11: #{tpu_custom_call.1} parent=1 // pred_check_branch
      %44 = sbr.rel (0) target = $region13
    $region12: #{tpu_custom_call.1} parent=1 // pred_region
      %46 = vsyncadd [#allocation6], 0
      %s48 = sshll.u32 %s2, 4
      %s49 = int_to_ptr.hbm [resolvable:$true] %s48
      %s50 = sshll.u32 [#allocation7], 4
      %s51 = int_to_ptr.vmem [resolvable:$true] %s50
      %53 = dma.hbm_to_vmem [thread:$0]  %s49, 64, %s51, [#allocation6]
    $region13: #{tpu_custom_call.1} parent=1 // pred_fallthru
      _
    // Predicated region
    $region14: #{tpu_custom_call.1} parent=1 // pred_check
      _
    $region15: #{tpu_custom_call.1} parent=1 // pred_check_branch
      %55 = sbr.rel (0) target = $region17
    $region16: #{tpu_custom_call.1} parent=1 // pred_region
      %57 = vsyncadd [#allocation9], 0
      %s58 = sshll.u32 %s3, 4
      %s59 = int_to_ptr.hbm [resolvable:$true] %s58
      %s60 = sshll.u32 [#allocation8], 4
      %s61 = int_to_ptr.vmem [resolvable:$true] %s60
      %66 = dma.hbm_to_vmem [thread:$0]  %s59, 1024, %s61, [#allocation9], 64, 64, 4
    $region17: #{tpu_custom_call.1} parent=1 // pred_fallthru
      _
    // Predicated region
    $region18: #{tpu_custom_call.1} parent=1 // pred_check
      _
    $region19: #{tpu_custom_call.1} parent=1 // pred_check_branch
      %68 = sbr.rel (0) target = $region21
    $region20: #{tpu_custom_call.1} parent=1 // pred_region
      %70 = vsyncadd [#allocation9], 0
      %s72 = sshll.u32 %s4, 4
      %s73 = int_to_ptr.hbm [resolvable:$true] %s72
      %s74 = sshll.u32 [#allocation10], 4
      %s75 = int_to_ptr.vmem [resolvable:$true] %s74
      %77 = dma.hbm_to_vmem [thread:$0]  %s73, 64, %s75, [#allocation9]
    $region21: #{tpu_custom_call.1} parent=1 // pred_fallthru
      _
    // Predicated region
    $region22: #{tpu_custom_call.1} parent=1 // pred_check
      _
    $region23: #{tpu_custom_call.1} parent=1 // pred_check_branch
      %79 = sbr.rel (0) target = $region25
    $region24: #{tpu_custom_call.1} parent=1 // pred_region
      %81 = vsyncadd [#allocation12], 0
      %s82 = sshll.u32 %s5, 4
      %s83 = int_to_ptr.hbm [resolvable:$true] %s82
      %s84 = sshll.u32 [#allocation11], 4
      %s85 = int_to_ptr.vmem [resolvable:$true] %s84
      %90 = dma.hbm_to_vmem [thread:$0]  %s83, 1024, %s85, [#allocation12], 64, 64, 4
    $region25: #{tpu_custom_call.1} parent=1 // pred_fallthru
      _
    // Predicated region
    $region26: #{tpu_custom_call.1} parent=1 // pred_check
      _
    $region27: #{tpu_custom_call.1} parent=1 // pred_check_branch
      %92 = sbr.rel (0) target = $region29
    $region28: #{tpu_custom_call.1} parent=1 // pred_region
      _
    $region29: #{tpu_custom_call.1} parent=1 // pred_fallthru
      _
    // Predicated region
    $region30: #{tpu_custom_call.1} parent=1 // pred_check
      _
    $region31: #{tpu_custom_call.1} parent=1 // pred_check_branch
      %94 = sbr.rel (0) target = $region33
    $region32: #{tpu_custom_call.1} parent=1 // pred_region
      %96 = dma.done [#allocation3], 512
    $region33: #{tpu_custom_call.1} parent=1 // pred_fallthru
      _
    // Predicated region
    $region34: #{tpu_custom_call.1} parent=1 // pred_check
      _
    $region35: #{tpu_custom_call.1} parent=1 // pred_check_branch
      %98 = sbr.rel (0) target = $region37
    $region36: #{tpu_custom_call.1} parent=1 // pred_region
      %100 = dma.done [#allocation6], 1024
    $region37: #{tpu_custom_call.1} parent=1 // pred_fallthru
      _
    // Predicated region
    $region38: #{tpu_custom_call.1} parent=1 // pred_check
      _
    $region39: #{tpu_custom_call.1} parent=1 // pred_check_branch
      %102 = sbr.rel (0) target = $region41
    $region40: #{tpu_custom_call.1} parent=1 // pred_region
      %104 = dma.done [#allocation6], 64
    $region41: #{tpu_custom_call.1} parent=1 // pred_fallthru
      _
    // Predicated region
    $region42: #{tpu_custom_call.1} parent=1 // pred_check
      _
    $region43: #{tpu_custom_call.1} parent=1 // pred_check_branch
      %106 = sbr.rel (0) target = $region45
    $region44: #{tpu_custom_call.1} parent=1 // pred_region
      %108 = dma.done [#allocation9], 1024
    $region45: #{tpu_custom_call.1} parent=1 // pred_fallthru
      _
    // Predicated region
    $region46: #{tpu_custom_call.1} parent=1 // pred_check
      _
    $region47: #{tpu_custom_call.1} parent=1 // pred_check_branch
      %110 = sbr.rel (0) target = $region49
    $region48: #{tpu_custom_call.1} parent=1 // pred_region
      %112 = dma.done [#allocation9], 64
    $region49: #{tpu_custom_call.1} parent=1 // pred_fallthru
      _
    // Predicated region
    $region50: #{tpu_custom_call.1} parent=1 // pred_check
      _
    $region51: #{tpu_custom_call.1} parent=1 // pred_check_branch
      %114 = sbr.rel (0) target = $region53
    $region52: #{tpu_custom_call.1} parent=1 // pred_region
      %116 = dma.done [#allocation12], 1024
    $region53: #{tpu_custom_call.1} parent=1 // pred_fallthru
      _
    %v117 = vld [vmem:[#allocation2] sm:$0xff]
    %v118 = vld [vmem:[#allocation2 + $0x8] sm:$0xff]
    %v119 = vld [vmem:[#allocation2 + $0x10] sm:$0xff]
    %v120 = vld [vmem:[#allocation2 + $0x18] sm:$0xff]
    %vm121 = vcmp.ne.f32.partialorder %v117, %v117
    %vm122 = vcmp.ne.f32.partialorder %v118, %v118
    %vm123 = vcmp.ne.f32.partialorder %v119, %v119
    %vm124 = vcmp.ne.f32.partialorder %v120, %v120
    %v125 = vsel %vm121, 0.0, %v117
    %v126 = vsel %vm122, 0.0, %v118
    %v127 = vsel %vm123, 0.0, %v119
    %v128 = vsel %vm124, 0.0, %v120
    %vm129 = vcmp.eq.f32.partialorder %v125, inf
    %vm130 = vcmp.eq.f32.partialorder %v126, inf
    %vm131 = vcmp.eq.f32.partialorder %v127, inf
    %vm132 = vcmp.eq.f32.partialorder %v128, inf
    %v133 = vsel %vm129, 3.4028235e+38, %v125
    %v134 = vsel %vm130, 3.4028235e+38, %v126
    %v135 = vsel %vm131, 3.4028235e+38, %v127
    %v136 = vsel %vm132, 3.4028235e+38, %v128
    %vm137 = vcmp.eq.f32.partialorder %v133, -inf
    %vm138 = vcmp.eq.f32.partialorder %v134, -inf
    %vm139 = vcmp.eq.f32.partialorder %v135, -inf
    %vm140 = vcmp.eq.f32.partialorder %v136, -inf
    %v141 = vsel %vm137, -3.4028235e+38, %v133
    %v142 = vsel %vm138, -3.4028235e+38, %v134
    %v143 = vsel %vm139, -3.4028235e+38, %v135
    %v144 = vsel %vm140, -3.4028235e+38, %v136
    %v145 = vmax.f32 %v141, -3.3895314e+38
    %v146 = vmax.f32 %v142, -3.3895314e+38
    %v147 = vmax.f32 %v143, -3.3895314e+38
    %v148 = vmax.f32 %v144, -3.3895314e+38
    %v149 = vmin.f32 %v145, 3.3895314e+38
    %v150 = vmin.f32 %v146, 3.3895314e+38
    %v151 = vmin.f32 %v147, 3.3895314e+38
    %v152 = vmin.f32 %v148, 3.3895314e+38
    %v153 = vlaneseq
    %v154 = vshrl.u32 %v153, 7
    %v155 = vadd.s32 %v154, 8
    %v156 = vadd.s32 %v154, 16
    %v157 = vadd.s32 %v154, 24
    %vm158 = vcmp.lt.s32.totalorder %v154, 30
    %vm159 = vcmp.lt.s32.totalorder %v155, 30
    %vm160 = vcmp.lt.s32.totalorder %v156, 30
    %vm161 = vcmp.lt.s32.totalorder %v157, 30
    %v162 = vsel %vm158, 1, 0
    %v163 = vsel %vm159, 1, 0
    %v164 = vsel %vm160, 1, 0
    %v165 = vsel %vm161, 1, 0
    %v166 = vcvt.s32.f32 %v162
    %v167 = vcvt.s32.f32 %v163
    %v168 = vcvt.s32.f32 %v164
    %v169 = vcvt.s32.f32 %v165
    %v170 = vld [vmem:[#allocation7] sm:$0x7]
    %v171 = vpack.c.bf16 %v150, %v149
    %v172 = vpack.c.bf16 %v152, %v151
    %v173 = vld [vmem:[#allocation5] sm:$0xf]
    %v174 = vld [vmem:[#allocation5 + $0x4] sm:$0xf]
    %v175 = vld [vmem:[#allocation5 + $0x8] sm:$0xf]
    %v176 = vld [vmem:[#allocation5 + $0xc] sm:$0xf]
    %v177 = vld [vmem:[#allocation5 + $0x10] sm:$0xf]
    %v178 = vld [vmem:[#allocation5 + $0x14] sm:$0xf]
    %v179 = vld [vmem:[#allocation5 + $0x18] sm:$0xf]
    %v180 = vld [vmem:[#allocation5 + $0x1c] sm:$0xf]
    %v181 = vld [vmem:[#allocation5 + $0x20] sm:$0xf]
    %v182 = vld [vmem:[#allocation5 + $0x24] sm:$0xf]
    %v183 = vld [vmem:[#allocation5 + $0x28] sm:$0xf]
    %v184 = vld [vmem:[#allocation5 + $0x2c] sm:$0xf]
    %v185 = vld [vmem:[#allocation5 + $0x30] sm:$0xf]
    %v186 = vld [vmem:[#allocation5 + $0x34] sm:$0xf]
    %v187 = vld [vmem:[#allocation5 + $0x38] sm:$0xf]
    %v188 = vld [vmem:[#allocation5 + $0x3c] sm:$0xf]
    %v189 = vperm.slane %v170, 0
    %v206 = vunpack.c.l.b16 %v173
    %v207 = vunpack.c.l.b16 %v174
    %v208 = vunpack.c.l.b16 %v175
    %v209 = vunpack.c.l.b16 %v176
    %v210 = vunpack.c.l.b16 %v177
    %v211 = vunpack.c.l.b16 %v178
    %v212 = vunpack.c.l.b16 %v179
    %v213 = vunpack.c.l.b16 %v180
    %v214 = vunpack.c.l.b16 %v181
    %v215 = vunpack.c.l.b16 %v182
    %v216 = vunpack.c.l.b16 %v183
    %v217 = vunpack.c.l.b16 %v184
    %v218 = vunpack.c.l.b16 %v185
    %v219 = vunpack.c.l.b16 %v186
    %v220 = vunpack.c.l.b16 %v187
    %v221 = vunpack.c.l.b16 %v188
    %v222 = vpack.c.b16 %v207, %v206
    %v223 = vpack.c.b16 %v209, %v208
    %v224 = vpack.c.b16 %v211, %v210
    %v225 = vpack.c.b16 %v213, %v212
    %v226 = vpack.c.b16 %v215, %v214
    %v227 = vpack.c.b16 %v217, %v216
    %v228 = vpack.c.b16 %v219, %v218
    %v229 = vpack.c.b16 %v221, %v220
    %238 = vmatpush.bf16.msra.mxu0 %v229
    %239 = vmatpush.bf16.msra.mxu0 %v228
    %240 = vmatpush.bf16.msra.mxu0 %v227
    %241 = vmatpush.bf16.msra.mxu0 %v226
    %242 = vmatpush.bf16.msra.mxu0 %v225
    %243 = vmatpush.bf16.msra.mxu0 %v224
    %244 = vmatpush.bf16.msra.mxu0 %v223
    %245 = vmatpush.bf16.msra.mxu0 %v222
    %246 = vmatmul.bf16.gmra.mxu0 %v171
    %v247 = vpop.f32.mrf.mxu0
    %v248 = vadd.f32 %v189, %v247
    %v249 = vpop.f32.mrf.mxu0
    %v250 = vadd.f32 %v189, %v249
    %251 = vmatmul.bf16.gmra.mxu0 %v172
    %v252 = vpop.f32.mrf.mxu0
    %v253 = vadd.f32 %v189, %v252
    %v254 = vpop.f32.mrf.mxu0
    %v255 = vadd.f32 %v189, %v254
    %256 = vdwg.mxu0
    %v257 = vmax.f32 %v248, 0.0
    %v258 = vmax.f32 %v250, 0.0
    %v259 = vmax.f32 %v253, 0.0
    %v260 = vmax.f32 %v255, 0.0
    %v261 = vmul.f32 %v257, %v166
    %v262 = vmul.f32 %v258, %v167
    %v263 = vmul.f32 %v259, %v168
    %v264 = vmul.f32 %v260, %v169
    %v265 = vadd.f32 %v261, %v262
    %v266 = vadd.f32 %v265, %v263
    %v267 = vadd.f32 %v266, %v264
    %v268 = vrot.slane %v267, 4
    %v269 = vadd.f32 %v267, %v268
    %v270 = vrot.slane %v269, 2
    %v271 = vadd.f32 %v269, %v270
    %v272 = vrot.slane %v271, 1
    %v273 = vadd.f32 %v271, %v272
    %v274 = vmul.f32 %v261, %v257
    %v275 = vmul.f32 %v262, %v258
    %v276 = vmul.f32 %v263, %v259
    %v277 = vmul.f32 %v264, %v260
    %v278 = vadd.f32 %v274, %v275
    %v279 = vadd.f32 %v278, %v276
    %v280 = vadd.f32 %v279, %v277
    %v281 = vrot.slane %v280, 4
    %v282 = vadd.f32 %v280, %v281
    %v283 = vrot.slane %v282, 2
    %v284 = vadd.f32 %v282, %v283
    %v285 = vrot.slane %v284, 1
    %v286 = vadd.f32 %v284, %v285
    %v287 = vmul.f32 %v273, 0.033333335
    %v288 = vmul.f32 %v286, 0.033333335
    %v289 = vmul.f32 %v287, %v287
    %v290 = vsub.f32 %v288, %v289
    %v291 = vmax.f32 %v290, 0.0
    %v292 = vadd.f32 %v291, 1e-05
    %v293 = vrsqrt.pop %v292
    %v294 = vmul.f32 %v293, %v292
    %v295 = vmul.f32 %v294, %v293
    %v296 = vmul.f32 0.5, %v295
    %v297 = vsub.f32 1.5, %v296
    %v298 = vmul.f32 %v293, %v297
    %vm299 = vweird.f32 %v292
    %vm300 = vweird.f32 %v293
    %vm301 = vmor %vm299, %vm300
    %v302 = vsel %vm301, %v293, %v298
    %v303 = vmul.f32 %v170, %v302
    %v304 = vmul.f32 %v287, %v303
    %v306 = vrot.slane %v304, 7
    %v308 = vsub.f32 %v170, %v306
    %v309 = vperm.slane %v303, 1
    %v310 = vmul.f32 %v257, %v309
    %v311 = vmul.f32 %v258, %v309
    %v312 = vmul.f32 %v259, %v309
    %v313 = vmul.f32 %v260, %v309
    %v314 = vperm.slane %v308, 2
    %v315 = vadd.f32 %v310, %v314
    %v316 = vadd.f32 %v311, %v314
    %v317 = vadd.f32 %v312, %v314
    %v318 = vadd.f32 %v313, %v314
    %v319 = vld [vmem:[#allocation10] sm:$0x7]
    %v320 = vpack.c.bf16 %v316, %v315
    %v321 = vpack.c.bf16 %v318, %v317
    %v322 = vld [vmem:[#allocation8] sm:$0xf]
    %v323 = vld [vmem:[#allocation8 + $0x4] sm:$0xf]
    %v324 = vld [vmem:[#allocation8 + $0x8] sm:$0xf]
    %v325 = vld [vmem:[#allocation8 + $0xc] sm:$0xf]
    %v326 = vld [vmem:[#allocation8 + $0x10] sm:$0xf]
    %v327 = vld [vmem:[#allocation8 + $0x14] sm:$0xf]
    %v328 = vld [vmem:[#allocation8 + $0x18] sm:$0xf]
    %v329 = vld [vmem:[#allocation8 + $0x1c] sm:$0xf]
    %v330 = vld [vmem:[#allocation8 + $0x20] sm:$0xf]
    %v331 = vld [vmem:[#allocation8 + $0x24] sm:$0xf]
    %v332 = vld [vmem:[#allocation8 + $0x28] sm:$0xf]
    %v333 = vld [vmem:[#allocation8 + $0x2c] sm:$0xf]
    %v334 = vld [vmem:[#allocation8 + $0x30] sm:$0xf]
    %v335 = vld [vmem:[#allocation8 + $0x34] sm:$0xf]
    %v336 = vld [vmem:[#allocation8 + $0x38] sm:$0xf]
    %v337 = vld [vmem:[#allocation8 + $0x3c] sm:$0xf]
    %v338 = vperm.slane %v319, 0
    %v355 = vunpack.c.l.b16 %v322
    %v356 = vunpack.c.l.b16 %v323
    %v357 = vunpack.c.l.b16 %v324
    %v358 = vunpack.c.l.b16 %v325
    %v359 = vunpack.c.l.b16 %v326
    %v360 = vunpack.c.l.b16 %v327
    %v361 = vunpack.c.l.b16 %v328
    %v362 = vunpack.c.l.b16 %v329
    %v363 = vunpack.c.l.b16 %v330
    %v364 = vunpack.c.l.b16 %v331
    %v365 = vunpack.c.l.b16 %v332
    %v366 = vunpack.c.l.b16 %v333
    %v367 = vunpack.c.l.b16 %v334
    %v368 = vunpack.c.l.b16 %v335
    %v369 = vunpack.c.l.b16 %v336
    %v370 = vunpack.c.l.b16 %v337
    %v371 = vpack.c.b16 %v356, %v355
    %v372 = vpack.c.b16 %v358, %v357
    %v373 = vpack.c.b16 %v360, %v359
    %v374 = vpack.c.b16 %v362, %v361
    %v375 = vpack.c.b16 %v364, %v363
    %v376 = vpack.c.b16 %v366, %v365
    %v377 = vpack.c.b16 %v368, %v367
    %v378 = vpack.c.b16 %v370, %v369
    %387 = vmatpush.bf16.msra.mxu0 %v378
    %388 = vmatpush.bf16.msra.mxu0 %v377
    %389 = vmatpush.bf16.msra.mxu0 %v376
    %390 = vmatpush.bf16.msra.mxu0 %v375
    %391 = vmatpush.bf16.msra.mxu0 %v374
    %392 = vmatpush.bf16.msra.mxu0 %v373
    %393 = vmatpush.bf16.msra.mxu0 %v372
    %394 = vmatpush.bf16.msra.mxu0 %v371
    %395 = vmatmul.bf16.gmra.mxu0 %v320
    %v396 = vpop.f32.mrf.mxu0
    %v397 = vadd.f32 %v338, %v396
    %v398 = vpop.f32.mrf.mxu0
    %v399 = vadd.f32 %v338, %v398
    %400 = vmatmul.bf16.gmra.mxu0 %v321
    %v401 = vpop.f32.mrf.mxu0
    %v402 = vadd.f32 %v338, %v401
    %v403 = vpop.f32.mrf.mxu0
    %v404 = vadd.f32 %v338, %v403
    %405 = vdwg.mxu0
    %v406 = vmax.f32 %v397, 0.0
    %v407 = vmax.f32 %v399, 0.0
    %v408 = vmax.f32 %v402, 0.0
    %v409 = vmax.f32 %v404, 0.0
    %v410 = vmul.f32 %v406, %v166
    %v411 = vmul.f32 %v407, %v167
    %v412 = vmul.f32 %v408, %v168
    %v413 = vmul.f32 %v409, %v169
    %v414 = vadd.f32 %v410, %v411
    %v415 = vadd.f32 %v414, %v412
    %v416 = vadd.f32 %v415, %v413
    %v417 = vrot.slane %v416, 4
    %v418 = vadd.f32 %v416, %v417
    %v419 = vrot.slane %v418, 2
    %v420 = vadd.f32 %v418, %v419
    %v421 = vrot.slane %v420, 1
    %v422 = vadd.f32 %v420, %v421
    %v423 = vmul.f32 %v410, %v406
    %v424 = vmul.f32 %v411, %v407
    %v425 = vmul.f32 %v412, %v408
    %v426 = vmul.f32 %v413, %v409
    %v427 = vadd.f32 %v423, %v424
    %v428 = vadd.f32 %v427, %v425
    %v429 = vadd.f32 %v428, %v426
    %v430 = vrot.slane %v429, 4
    %v431 = vadd.f32 %v429, %v430
    %v432 = vrot.slane %v431, 2
    %v433 = vadd.f32 %v431, %v432
    %v434 = vrot.slane %v433, 1
    %v435 = vadd.f32 %v433, %v434
    %v436 = vmul.f32 %v422, 0.033333335
    %v437 = vmul.f32 %v435, 0.033333335
    %v438 = vmul.f32 %v436, %v436
    %v439 = vsub.f32 %v437, %v438
    %v440 = vmax.f32 %v439, 0.0
    %v441 = vadd.f32 %v440, 1e-05
    %v442 = vrsqrt.pop %v441
    %v443 = vmul.f32 %v442, %v441
    %v444 = vmul.f32 %v443, %v442
    %v445 = vmul.f32 0.5, %v444
    %v446 = vsub.f32 1.5, %v445
    %v447 = vmul.f32 %v442, %v446
    %vm448 = vweird.f32 %v441
    %vm449 = vweird.f32 %v442
    %vm450 = vmor %vm448, %vm449
    %v451 = vsel %vm450, %v442, %v447
    %v452 = vmul.f32 %v319, %v451
    %v453 = vmul.f32 %v436, %v452
    %v455 = vrot.slane %v453, 7
    %v457 = vsub.f32 %v319, %v455
    %v458 = vperm.slane %v452, 1
    %v459 = vmul.f32 %v406, %v458
    %v460 = vmul.f32 %v407, %v458
    %v461 = vmul.f32 %v408, %v458
    %v462 = vmul.f32 %v409, %v458
    %v463 = vperm.slane %v457, 2
    %v464 = vadd.f32 %v459, %v463
    %v465 = vadd.f32 %v460, %v463
    %v466 = vadd.f32 %v461, %v463
    %v467 = vadd.f32 %v462, %v463
    %v468 = vpack.c.bf16 %v465, %v464
    %v469 = vpack.c.bf16 %v467, %v466
    %v470 = vld [vmem:[#allocation11] sm:$0xf]
    %v471 = vld [vmem:[#allocation11 + $0x4] sm:$0xf]
    %v472 = vld [vmem:[#allocation11 + $0x8] sm:$0xf]
    %v473 = vld [vmem:[#allocation11 + $0xc] sm:$0xf]
    %v474 = vld [vmem:[#allocation11 + $0x10] sm:$0xf]
    %v475 = vld [vmem:[#allocation11 + $0x14] sm:$0xf]
    %v476 = vld [vmem:[#allocation11 + $0x18] sm:$0xf]
    %v477 = vld [vmem:[#allocation11 + $0x1c] sm:$0xf]
    %v478 = vld [vmem:[#allocation11 + $0x20] sm:$0xf]
    %v479 = vld [vmem:[#allocation11 + $0x24] sm:$0xf]
    %v480 = vld [vmem:[#allocation11 + $0x28] sm:$0xf]
    %v481 = vld [vmem:[#allocation11 + $0x2c] sm:$0xf]
    %v482 = vld [vmem:[#allocation11 + $0x30] sm:$0xf]
    %v483 = vld [vmem:[#allocation11 + $0x34] sm:$0xf]
    %v484 = vld [vmem:[#allocation11 + $0x38] sm:$0xf]
    %v485 = vld [vmem:[#allocation11 + $0x3c] sm:$0xf]
    %v486 = vld [vmem:[%s6] sm:$0x1]
    %v488 = vperm.slane %v486, 0
    %v506 = vunpack.c.l.b16 %v470
    %v507 = vunpack.c.l.b16 %v471
    %v508 = vunpack.c.l.b16 %v472
    %v509 = vunpack.c.l.b16 %v473
    %v510 = vunpack.c.l.b16 %v474
    %v511 = vunpack.c.l.b16 %v475
    %v512 = vunpack.c.l.b16 %v476
    %v513 = vunpack.c.l.b16 %v477
    %v514 = vunpack.c.l.b16 %v478
    %v515 = vunpack.c.l.b16 %v479
    %v516 = vunpack.c.l.b16 %v480
    %v517 = vunpack.c.l.b16 %v481
    %v518 = vunpack.c.l.b16 %v482
    %v519 = vunpack.c.l.b16 %v483
    %v520 = vunpack.c.l.b16 %v484
    %v521 = vunpack.c.l.b16 %v485
    %v522 = vpack.c.b16 %v507, %v506
    %v523 = vpack.c.b16 %v509, %v508
    %v524 = vpack.c.b16 %v511, %v510
    %v525 = vpack.c.b16 %v513, %v512
    %v526 = vpack.c.b16 %v515, %v514
    %v527 = vpack.c.b16 %v517, %v516
    %v528 = vpack.c.b16 %v519, %v518
    %v529 = vpack.c.b16 %v521, %v520
    %538 = vmatpush.bf16.msra.mxu0 %v529
    %539 = vmatpush.bf16.msra.mxu0 %v528
    %540 = vmatpush.bf16.msra.mxu0 %v527
    %541 = vmatpush.bf16.msra.mxu0 %v526
    %542 = vmatpush.bf16.msra.mxu0 %v525
    %543 = vmatpush.bf16.msra.mxu0 %v524
    %544 = vmatpush.bf16.msra.mxu0 %v523
    %545 = vmatpush.bf16.msra.mxu0 %v522
    %546 = vmatmul.bf16.gmra.mxu0 %v468
    %v547 = vpop.f32.mrf.mxu0
    %v548 = vadd.f32 %v488, %v547
    %v549 = vpop.f32.mrf.mxu0
    %v550 = vadd.f32 %v488, %v549
    %551 = vmatmul.bf16.gmra.mxu0 %v469
    %v552 = vpop.f32.mrf.mxu0
    %v553 = vadd.f32 %v488, %v552
    %v554 = vpop.f32.mrf.mxu0
    %v555 = vadd.f32 %v488, %v554
    %556 = vdwg.mxu0
    %vm557 = vcmp.ne.f32.partialorder %v548, %v548
    %vm558 = vcmp.ne.f32.partialorder %v550, %v550
    %vm559 = vcmp.ne.f32.partialorder %v553, %v553
    %vm560 = vcmp.ne.f32.partialorder %v555, %v555
    %v561 = vsel %vm557, 0.0, %v548
    %v562 = vsel %vm558, 0.0, %v550
    %v563 = vsel %vm559, 0.0, %v553
    %v564 = vsel %vm560, 0.0, %v555
    %vm565 = vcmp.eq.f32.partialorder %v561, inf
    %vm566 = vcmp.eq.f32.partialorder %v562, inf
    %vm567 = vcmp.eq.f32.partialorder %v563, inf
    %vm568 = vcmp.eq.f32.partialorder %v564, inf
    %v569 = vsel %vm565, 3.4028235e+38, %v561
    %v570 = vsel %vm566, 3.4028235e+38, %v562
    %v571 = vsel %vm567, 3.4028235e+38, %v563
    %v572 = vsel %vm568, 3.4028235e+38, %v564
    %vm573 = vcmp.eq.f32.partialorder %v569, -inf
    %vm574 = vcmp.eq.f32.partialorder %v570, -inf
    %vm575 = vcmp.eq.f32.partialorder %v571, -inf
    %vm576 = vcmp.eq.f32.partialorder %v572, -inf
    %v577 = vsel %vm573, -3.4028235e+38, %v569
    %v578 = vsel %vm574, -3.4028235e+38, %v570
    %v579 = vsel %vm575, -3.4028235e+38, %v571
    %v580 = vsel %vm576, -3.4028235e+38, %v572
    %v581 = vmax.f32 %v577, -1000000.0
    %v582 = vmax.f32 %v578, -1000000.0
    %v583 = vmax.f32 %v579, -1000000.0
    %v584 = vmax.f32 %v580, -1000000.0
    %v585 = vmin.f32 %v581, 1000000.0
    %v586 = vmin.f32 %v582, 1000000.0
    %v587 = vmin.f32 %v583, 1000000.0
    %v588 = vmin.f32 %v584, 1000000.0
    %589 = vst [vmem:[#allocation13] sm:$0xff] %v585
    %590 = vst [vmem:[#allocation13 + $0x8] sm:$0xff] %v586
    %591 = vst [vmem:[#allocation13 + $0x10] sm:$0xff] %v587
    %592 = vst [vmem:[#allocation13 + $0x18] sm:$0xff] %v588
    // Predicated region
    $region54: #{tpu_custom_call.1} parent=1 // pred_check
      _
    $region55: #{tpu_custom_call.1} parent=1 // pred_check_branch
      %594 = sbr.rel (0) target = $region57
    $region56: #{tpu_custom_call.1} parent=1 // pred_region
      %596 = vsyncadd [#allocation4], 0
      %s597 = sshll.u32 [#allocation13], 4
      %s598 = int_to_ptr.vmem [resolvable:$true] %s597
      %s599 = sshll.u32 %s7, 4
      %s600 = int_to_ptr.hbm [resolvable:$true] %s599
      %605 = dma.vmem_to_hbm [thread:$0]  %s598, 512, %s600, [#allocation4], 128, 128, 8
    $region57: #{tpu_custom_call.1} parent=1 // pred_fallthru
      _
    // Predicated region
    $region58: #{tpu_custom_call.1} parent=1 // pred_check
      _
    $region59: #{tpu_custom_call.1} parent=1 // pred_check_branch
      %607 = sbr.rel (0) target = $region61
    $region60: #{tpu_custom_call.1} parent=1 // pred_region
      %609 = dma.done [#allocation4], 512
    $region61: #{tpu_custom_call.1} parent=1 // pred_fallthru
      _
    %610 = vsyncpa [#allocation3], 1
    %611 = vsyncpa [#allocation6], 1
    %612 = vsyncpa [#allocation9], 1
    %613 = vsyncpa [#allocation12], 1
    %614 = vsyncpa [#allocation4], 1

</llo_original>
